<compile_context>
chip_gen: v7x
topology: tpu7x:2x2x1
jax: 0.10.0
libtpu: 0.0.40
codegen_flags: <defaults>
</compile_context>

<pallas_src>
import functools
from functools import partial

import jax
import jax.numpy as jnp
from jax.experimental import pallas as pl
from jax.experimental.pallas import tpu as pltpu


# ----------------------------- small helpers ---------------------------------

def _cdiv(a, b):
    return -(-a // b)


def _round_up(a, m):
    return _cdiv(a, m) * m


def _round_down(a, m):
    return (a // m) * m


# Sublane packing factor per itemsize (one vreg holds 8/16/32 rows).
_SUBLANE_PACK = {1: 32, 2: 16, 4: 8, 8: 8}


def _factor_2d(shape, n):
    """Free (contiguous-reshape) 2-D factorization (rows, cols) of the flat size."""
    if n % 128 == 0:
        return n // 128, 128
    c = 1
    for d in reversed(shape):
        c *= int(d)
        if c >= 128:
            break
    return n // c, c


# ------------------------------- the kernel ----------------------------------

def _swish_kernel(x_ref, o_ref, *, beta):
    x = x_ref[...]
    xf = x.astype(jnp.float32)          # f32 compute path (mandatory on v5e)
    y = xf / (1.0 + jnp.exp(-beta * xf))
    o_ref[...] = y.astype(o_ref.dtype)


def _swish_pallas_2d(x2d, beta, tile_bytes):
    R, C = x2d.shape
    dtype = x2d.dtype
    itemsize = jnp.dtype(dtype).itemsize
    pack = _SUBLANE_PACK.get(itemsize, 8)

    # --- lane (minor) tile: whole last dim if it fits, else 128-multiples ---
    if C <= 128 or C * itemsize * pack <= tile_bytes:
        tile_c = C                       # full extent: always legal
    else:
        max_lane = max(128, _round_down(tile_bytes // (pack * itemsize), 128))
        if C % 128 == 0:
            tile_c = min(max_lane, C)
        else:
            # partial final lane block is masked by Pallas (no pre-pad needed)
            tile_c = min(max_lane, _round_down(C, 128))

    # --- sublane (second-minor) tile: big blocks, >= ~8 grid steps when possible ---
    min_tile_bytes = min(1 << 20, tile_bytes)   # ~1 MiB minimum tile
    rows_budget = max(pack, _round_down(tile_bytes // (tile_c * itemsize), pack))
    min_rows = max(pack, _round_down(min_tile_bytes // (tile_c * itemsize), pack))
    min_rows = min(min_rows, rows_budget)
    eight_step_rows = _round_up(_cdiv(R, 8), pack)
    tile_r = min(rows_budget, max(min_rows, eight_step_rows))
    if tile_r >= R:
        tile_r = R                       # full extent: always legal

    grid = (_cdiv(R, tile_r), _cdiv(C, tile_c))

    n = R * C
    cost = pl.CostEstimate(
        flops=4 * n,
        transcendentals=n,
        bytes_accessed=2 * n * itemsize,
    )

    return pl.pallas_call(
        partial(_swish_kernel, beta=beta),
        out_shape=jax.ShapeDtypeStruct((R, C), dtype),
        grid=grid,
        in_specs=[pl.BlockSpec((tile_r, tile_c), lambda i, j: (i, j))],
        out_specs=pl.BlockSpec((tile_r, tile_c), lambda i, j: (i, j)),
        compiler_params=pltpu.CompilerParams(
            dimension_semantics=("parallel", "parallel"),
            vmem_limit_bytes=48 * 1024 * 1024,
        ),
        cost_estimate=cost,
    )(x2d)


# ------------------------------- public wrapper -------------------------------

def _swish_impl(x, *, beta, tile_bytes, fallback_elems):
    n = x.size
    if n == 0:
        return x
    orig_dtype = x.dtype

    # Tiny tensors: a standalone pallas_call launch costs more than the math;
    # let XLA fuse the plain expression instead.
    if n < fallback_elems:
        xf = x.astype(jnp.float32)
        return (xf / (1.0 + jnp.exp(-beta * xf))).astype(orig_dtype)

    R, C = _factor_2d(x.shape, n)
    x2d = x.reshape(R, C)                # contiguous reshape: metadata-only under jit
    out2d = _swish_pallas_2d(x2d, beta, tile_bytes)
    return out2d.reshape(x.shape)


_swish_jit = jax.jit(
    _swish_impl, static_argnames=("beta", "tile_bytes", "fallback_elems")
)


@functools.lru_cache(maxsize=None)
def _default_tile_bytes():
    # v7x: ~3.2 TB/s HBM per TC -> bigger tiles to amortize per-grid-step overhead.
    try:
        kind = jax.devices()[0].device_kind.lower()
    except Exception:
        kind = ""
    return (6 << 20) if "v7" in kind else (4 << 20)


def swish_pallas(x, beta=1.0, *, tile_bytes=None, fallback_elems=1024):
    """Elementwise swish on an arbitrarily-shaped array via a Pallas TPU kernel."""
    if tile_bytes is None:
        tile_bytes = _default_tile_bytes()
    return _swish_jit(
        x,
        beta=float(beta),
        tile_bytes=int(tile_bytes),
        fallback_elems=int(fallback_elems),
    )


class Swish:
    """JAX/Pallas port of the PyTorch Swish module (forward only)."""

    # TODO(synk): SwishOP.backward (custom gradient) not implemented; forward only.

    def __init__(self, beta=1.0):
        # beta is baked in as a static float (one compile per distinct beta).
        self.beta = beta

    def __call__(self, x):
        return swish_pallas(x, self.beta)


def _ref_swish(x, beta=1.0):
    return x / (1.0 + jnp.exp(-beta * x))


if __name__ == "__main__":
    key = jax.random.PRNGKey(0)
    k1, k2, k3, k4 = jax.random.split(key, 4)

    # 1) Lane-aligned NCHW f32 input (2*4*16*16 = 2048 = 16 * 128).
    x1 = jax.random.normal(k1, (2, 4, 16, 16), dtype=jnp.float32)
    mod = Swish(beta=1.0)
    y1 = jax.block_until_ready(mod(x1))
    assert y1.shape == x1.shape and y1.dtype == x1.dtype
    assert jnp.allclose(y1, _ref_swish(x1, 1.0), atol=1e-6, rtol=1e-6)

    # 2) Non-128-multiple total size: free (3, 1600) view, no pad/slice copies.
    x2 = jax.random.normal(k2, (1, 3, 40, 40), dtype=jnp.float32)
    y2 = jax.block_until_ready(swish_pallas(x2, beta=1.5))
    assert y2.shape == x2.shape and y2.dtype == x2.dtype
    assert jnp.allclose(y2, _ref_swish(x2, 1.5), atol=1e-6, rtol=1e-6)

    # 3) Multi-step grid + masked partial final row block (force small tiles).
    x3 = jax.random.normal(k3, (520, 128), dtype=jnp.float32)
    y3 = jax.block_until_ready(swish_pallas(x3, beta=0.7, tile_bytes=64 * 1024))
    assert jnp.allclose(y3, _ref_swish(x3, 0.7), atol=1e-6, rtol=1e-6)

    # 4) bf16 path (sublane packing factor 16).
    x4 = jax.random.normal(k4, (8, 256), dtype=jnp.bfloat16)
    y4 = jax.block_until_ready(swish_pallas(x4, beta=1.0))
    ref4 = _ref_swish(x4.astype(jnp.float32), 1.0).astype(jnp.bfloat16)
    assert y4.dtype == jnp.bfloat16 and y4.shape == x4.shape
    assert jnp.allclose(
        y4.astype(jnp.float32), ref4.astype(jnp.float32), atol=2e-2, rtol=2e-2
    )

    print("KERNEL_OK")
</pallas_src>

<mosaic_0001>
module attributes {stable_mosaic.version = 11 : i64} {
  func.func @_swish_kernel(%arg0: i32, %arg1: i32, %arg2: memref<16x128xf32, #tpu.memory_space<vmem>>, %arg3: memref<16x128xf32, #tpu.memory_space<vmem>>) attributes {dimension_semantics = [#tpu.dimension_semantics<parallel>, #tpu.dimension_semantics<parallel>], iteration_bounds = array<i64: 1, 1>, scalar_prefetch = 0 : i64, scratch_operands = 0 : i64, tpu.core_type = #tpu.core_type<tc>, window_params = [{transform_indices = @transform_0, window_bounds = array<i64: 16, 128>}, {transform_indices = @transform_1, window_bounds = array<i64: 16, 128>}]} {
    %c0 = arith.constant 0 : index
    %c0_0 = arith.constant 0 : index
    %0 = vector.load %arg2[%c0, %c0_0] : memref<16x128xf32, #tpu.memory_space<vmem>>, vector<16x128xf32>
    %cst = arith.constant -1.000000e+00 : f32
    %1 = vector.broadcast %cst : f32 to vector<16x128xf32>
    %2 = arith.mulf %1, %0 : vector<16x128xf32>
    %3 = math.exp %2 : vector<16x128xf32>
    %cst_1 = arith.constant 1.000000e+00 : f32
    %4 = vector.broadcast %cst_1 : f32 to vector<16x128xf32>
    %5 = arith.addf %4, %3 : vector<16x128xf32>
    %6 = arith.divf %0, %5 : vector<16x128xf32>
    %c0_2 = arith.constant 0 : index
    %c0_3 = arith.constant 0 : index
    %7 = vector.load %arg3[%c0_2, %c0_3] : memref<16x128xf32, #tpu.memory_space<vmem>>, vector<16x128xf32>
    tpu.vector_store %arg3[%c0_2, %c0_3], %6 {strides = array<i32>} : memref<16x128xf32, #tpu.memory_space<vmem>>, vector<16x128xf32>,
    return
  }
  func.func @transform_0(%arg0: i32, %arg1: i32) -> (i32, i32) {
    %c0_i32 = arith.constant 0 : i32
    return %arg0, %arg1 : i32, i32
  }
  func.func @transform_1(%arg0: i32, %arg1: i32) -> (i32, i32) {
    %c0_i32 = arith.constant 0 : i32
    return %arg0, %arg1 : i32, i32
  }
}

</mosaic_0001>

<llo_original>
// kernel: _swish_impl.1
$region0: #{_swish_impl.1}
  #allocation0 [shape = 'u32[]', space=smem, size = 0x4, offset = 0x4, fixed_abs, tag = 'smem constant byte address 0x4 - core index']
  #allocation1 [shape = 'u32[144,128]{1,0:T(1,128)}', space=vmem, size = 0x12000, scoped, tag = 'internal scratch']
  %s0 = inlined_call_operand.vmem [shape: f32[16,128], index: 0, kind: input, shape index: {}]
  %s1 = inlined_call_operand.vmem [shape: f32[16,128], index: 1, kind: output, shape index: {}]
  %s2 = sld [smem:[#allocation0]]
  $region14: #{_swish_impl.1} parent=0
    _
  %s4 = ssub.s32 1, %s2
  %s5 = scalar_select 0, %s4, %s2
  // Predicated region
  $region2: #{_swish_impl.1} parent=0 // pred_check
    _
  $region3: #{_swish_impl.1} parent=0 // pred_check_branch
    %7 = sbr.rel (0) target = $region5
  $region4: #{_swish_impl.1} parent=0 // pred_region
    _
  $region5: #{_swish_impl.1} parent=0 // pred_fallthru
    _
  %v8 = vld [vmem:[%s0] sm:$0xff]
  %v9 = vld [vmem:[%s0 + $0x8] sm:$0xff]
  %v10 = vmul.f32 %v8, -1.0
  %v11 = vmul.f32 %v9, -1.0
  %v12 = vmul.f32 %v10, 1.442695
  %v13 = vpow.pop %v12
  %v14 = vmul.f32 %v11, 1.442695
  %v15 = vpow.pop %v14
  %v16 = vadd.f32 %v13, 1.0
  %v17 = vadd.f32 %v15, 1.0
  %v18 = vrcp.pop %v16
  %v19 = vmul.f32 %v8, %v18
  %v20 = vrcp.pop %v17
  %v21 = vmul.f32 %v9, %v20
  %22 = vst [vmem:[%s1] sm:$0xff] %v19
  %23 = vst [vmem:[%s1 + $0x8] sm:$0xff] %v21
  // Predicated region
  $region6: #{_swish_impl.1} parent=0 // pred_check
    _
  $region7: #{_swish_impl.1} parent=0 // pred_check_branch
    %25 = sbr.rel (0) target = $region9
  $region8: #{_swish_impl.1} parent=0 // pred_region
    _
  $region9: #{_swish_impl.1} parent=0 // pred_fallthru
    _
  // Predicated region
  $region10: #{_swish_impl.1} parent=0 // pred_check
    _
  $region11: #{_swish_impl.1} parent=0 // pred_check_branch
    %27 = sbr.rel (0) target = $region13
  $region12: #{_swish_impl.1} parent=0 // pred_region
    _
  $region13: #{_swish_impl.1} parent=0 // pred_fallthru
    _

</llo_original>
